<compile_context>
chip_gen: v7x
topology: tpu7x:2x2x1
jax: 0.10.0
libtpu: 0.0.40
codegen_flags: <defaults>
</compile_context>

<pallas_src>
import jax
import jax.numpy as jnp
from jax.experimental import pallas as pl
from jax.experimental.pallas import tpu as pltpu


def ctc_embed_kernel(x_ref, w_ref, b_ref, o_ref):
    # x_ref: (TB, S, F) f32   w_ref: (F, D) bf16   b_ref: (1, D) f32   o_ref: (TB, D) f32
    x = x_ref[...]                                           # (TB, S, F)
    inv_s = jnp.float32(1.0 / x.shape[1])
    # Mean over the sequence axis in f32 on the VPU (commutes with the linear
    # stand-in encoder, so the matmul shrinks from (S,F)x(F,D) per row to one
    # (TB,F)x(F,D)).
    x_mean = jnp.sum(x, axis=1) * inv_s                      # (TB, F) f32
    # bf16 MXU matmul, f32 accumulate.
    h = jnp.dot(x_mean.astype(jnp.bfloat16), w_ref[...],
                preferred_element_type=jnp.float32)          # (TB, D) f32
    # Bias added once per output row, after the reduction.
    o_ref[...] = (h + b_ref[...]).astype(o_ref.dtype)


def _pick_batch_tile(B):
    # A batch tile that is a multiple of 8 (sublane-dense) and divides B;
    # fall back to the full batch if B is not a multiple of 8.
    if B % 8 != 0:
        return B
    tb = min(B, 128)
    while B % tb != 0:
        tb -= 8
    return tb


def ctc_forward(data, w, b):
    """data: [B, S, F] f32, w: [F, D] bf16, b: [1, D] f32 -> embeds [B, D] f32."""
    B, S, F = data.shape
    D = w.shape[1]
    tb = _pick_batch_tile(B)
    grid = (B // tb,)

    # NOTE: for realistic encoder sizes (F, D in the thousands) the F axis
    # should be added as a trailing "arbitrary" reduction grid axis with a
    # VMEM f32 accumulator, and vmem_limit_bytes set explicitly so the tiling
    # also fits v7x's 64 MiB VMEM.  At these sizes everything is resident.
    cost = pl.CostEstimate(
        flops=2 * B * F * D,
        transcendentals=0,
        bytes_accessed=(data.size * 4 + w.size * 2 + b.size * 4 + B * D * 4),
    )

    return pl.pallas_call(
        ctc_embed_kernel,
        out_shape=jax.ShapeDtypeStruct((B, D), jnp.float32),
        grid_spec=pltpu.PrefetchScalarGridSpec(
            num_scalar_prefetch=0,
            grid=grid,
            in_specs=[
                pl.BlockSpec((tb, S, F), lambda i: (i, 0, 0)),  # TB batch rows / step
                pl.BlockSpec((F, D), lambda i: (0, 0)),         # full bf16 weight, resident
                pl.BlockSpec((1, D), lambda i: (0, 0)),         # bias, resident
            ],
            out_specs=pl.BlockSpec((tb, D), lambda i: (i, 0)),  # lane/sublane-dense output
        ),
        compiler_params=pltpu.CompilerParams(
            dimension_semantics=("parallel",),
        ),
        cost_estimate=cost,
    )(data, w, b)


def ctc_forward_ref(data, w, b):
    # Same math in plain JAX: mean over seq, then bf16 matmul with f32 accumulate.
    x_mean = jnp.mean(data, axis=1)
    h = jnp.dot(x_mean.astype(jnp.bfloat16), w.astype(jnp.bfloat16),
                preferred_element_type=jnp.float32)
    return h + b


if __name__ == "__main__":
    # Small but TPU-friendly shapes: batch=16 (two 8-row blocks -> 2 parallel
    # grid steps), seq=8, feat=128, hidden=128 (lane-dense output).
    B, S, F, D = 16, 8, 128, 128

    key = jax.random.PRNGKey(0)
    k_x, k_w, k_b = jax.random.split(key, 3)
    data = jax.random.normal(k_x, (B, S, F), dtype=jnp.float32)
    w = (jax.random.normal(k_w, (F, D), dtype=jnp.float32) * 0.05).astype(jnp.bfloat16)
    b = jax.random.normal(k_b, (1, D), dtype=jnp.float32) * 0.01

    out = ctc_forward(data, w, b)
    jax.block_until_ready(out)

    ref = ctc_forward_ref(data, w, b)
    assert out.shape == (B, D)
    assert jnp.allclose(out, ref, atol=1e-3, rtol=1e-3), "mismatch vs. JAX reference"

    print("KERNEL_OK")
</pallas_src>

<mosaic_0001>
module attributes {stable_mosaic.version = 11 : i64} {
  func.func @ctc_embed_kernel(%arg0: i32, %arg1: memref<16x8x128xf32, #tpu.memory_space<vmem>>, %arg2: memref<128x128xbf16, #tpu.memory_space<vmem>>, %arg3: memref<1x128xf32, #tpu.memory_space<vmem>>, %arg4: memref<16x128xf32, #tpu.memory_space<vmem>>) attributes {dimension_semantics = [#tpu.dimension_semantics<parallel>], iteration_bounds = array<i64: 1>, scalar_prefetch = 0 : i64, scratch_operands = 0 : i64, tpu.core_type = #tpu.core_type<tc>, window_params = [{transform_indices = @transform_0, window_bounds = array<i64: 16, 8, 128>}, {pipeline_mode = #tpu.pipeline_mode<synchronous>, transform_indices = @transform_1, window_bounds = array<i64: 128, 128>}, {pipeline_mode = #tpu.pipeline_mode<synchronous>, transform_indices = @transform_2, window_bounds = array<i64: 1, 128>}, {transform_indices = @transform_3, window_bounds = array<i64: 16, 128>}]} {
    %c0 = arith.constant 0 : index
    %c0_0 = arith.constant 0 : index
    %c0_1 = arith.constant 0 : index
    %0 = vector.load %arg1[%c0, %c0_0, %c0_1] : memref<16x8x128xf32, #tpu.memory_space<vmem>>, vector<16x8x128xf32>
    %cst = arith.constant dense<0.000000e+00> : vector<16x128xf32>
    %1 = vector.multi_reduction <add>, %0, %cst [1] : vector<16x8x128xf32> to vector<16x128xf32>
    %cst_2 = arith.constant 1.250000e-01 : f32
    %2 = vector.broadcast %cst_2 : f32 to vector<16x128xf32>
    %3 = arith.mulf %1, %2 : vector<16x128xf32>
    %4 = arith.truncf %3 : vector<16x128xf32> to vector<16x128xbf16>
    %c0_3 = arith.constant 0 : index
    %c0_4 = arith.constant 0 : index
    %5 = vector.load %arg2[%c0_3, %c0_4] : memref<128x128xbf16, #tpu.memory_space<vmem>>, vector<128x128xbf16>
    %cst_5 = arith.constant dense<0.000000e+00> : vector<16x128xf32>
    %6 = tpu.matmul %4, %5, %cst_5 {dimension_numbers = #tpu.dot_dimension_numbers<[1], [0], [0], [1], [0, 0, 1, 1], [], []>} : vector<16x128xbf16>, vector<128x128xbf16>, vector<16x128xf32> -> vector<16x128xf32>
    %c0_6 = arith.constant 0 : index
    %c0_7 = arith.constant 0 : index
    %7 = vector.load %arg3[%c0_6, %c0_7] : memref<1x128xf32, #tpu.memory_space<vmem>>, vector<1x128xf32>
    %8 = vector.broadcast %7 : vector<1x128xf32> to vector<16x128xf32>
    %9 = arith.addf %6, %8 : vector<16x128xf32>
    %c0_8 = arith.constant 0 : index
    %c0_9 = arith.constant 0 : index
    %10 = vector.load %arg4[%c0_8, %c0_9] : memref<16x128xf32, #tpu.memory_space<vmem>>, vector<16x128xf32>
    tpu.vector_store %arg4[%c0_8, %c0_9], %9 {strides = array<i32>} : memref<16x128xf32, #tpu.memory_space<vmem>>, vector<16x128xf32>,
    return
  }
  func.func @transform_0(%arg0: i32) -> (i32, i32, i32) {
    %c0_i32 = arith.constant 0 : i32
    %c0_i32_0 = arith.constant 0 : i32
    %c0_i32_1 = arith.constant 0 : i32
    return %arg0, %c0_i32, %c0_i32_0 : i32, i32, i32
  }
  func.func @transform_1(%arg0: i32) -> (i32, i32) {
    %c0_i32 = arith.constant 0 : i32
    %c0_i32_0 = arith.constant 0 : i32
    %c0_i32_1 = arith.constant 0 : i32
    return %c0_i32, %c0_i32_0 : i32, i32
  }
  func.func @transform_2(%arg0: i32) -> (i32, i32) {
    %c0_i32 = arith.constant 0 : i32
    %c0_i32_0 = arith.constant 0 : i32
    %c0_i32_1 = arith.constant 0 : i32
    return %c0_i32, %c0_i32_0 : i32, i32
  }
  func.func @transform_3(%arg0: i32) -> (i32, i32) {
    %c0_i32 = arith.constant 0 : i32
    %c0_i32_0 = arith.constant 0 : i32
    return %arg0, %c0_i32 : i32, i32
  }
}

</mosaic_0001>

<llo_original>
// kernel: tpu_custom_call.1
$region0: #{tpu_custom_call.1}
  #allocation0 [shape = 'u32[]', space=smem, size = 0x4, offset = 0x4, fixed_abs, tag = 'smem constant byte address 0x4 - core index']
  #allocation1 [shape = 'u32[144,128]{1,0:T(1,128)}', space=vmem, size = 0x12000, scoped, tag = 'internal scratch']
  %s0 = inlined_call_operand.hbm [shape: f32[16,8,128], index: 0, kind: input, shape index: {}]
  %s1 = inlined_call_operand.hbm [shape: bf16[128,128], index: 1, kind: input, shape index: {}]
  %s2 = inlined_call_operand.vmem [shape: f32[1,128], index: 2, kind: input, shape index: {}]
  %s3 = inlined_call_operand.hbm [shape: f32[16,128], index: 3, kind: output, shape index: {}]
  %s4 = sld [smem:[#allocation0]]
  $region30: #{tpu_custom_call.1} parent=0
    _
  %s6 = ssub.s32 1, %s4
  %s7 = scalar_select 0, %s6, %s4
  $region1: #{tpu_custom_call.1} parent=0
    #allocation2 [shape = 'u8[65536]{0}', space=vmem, size = 0x10000, scoped, tag = 'input window, operand 0, single buffered']
    #allocation3 [shape = 's32[1]{0}', space=sflag, size = 0x4, scoped, tag = 'scoped memory for tpu_custom_call.1']
    #allocation4 [shape = 's32[1]{0}', space=sflag, size = 0x4, scoped, tag = 'scoped memory for tpu_custom_call.1']
    #allocation5 [shape = 'u8[32768]{0}', space=vmem, size = 0x8000, scoped, tag = 'input window, operand 1, single buffered']
    #allocation6 [shape = 's32[1]{0}', space=sflag, size = 0x4, scoped, tag = 'scoped memory for tpu_custom_call.1']
    #allocation7 [shape = 'u8[8192]{0}', space=vmem, size = 0x2000, scoped, tag = 'output window, operand 0, single buffered']
    %8 = vsyncpa [#allocation3], 0
    %9 = vsyncpa [#allocation6], 0
    %10 = vsyncpa [#allocation4], 0
    // Predicated region
    $region2: #{tpu_custom_call.1} parent=1 // pred_check
      _
    $region3: #{tpu_custom_call.1} parent=1 // pred_check_branch
      %12 = sbr.rel (0) target = $region5
    $region4: #{tpu_custom_call.1} parent=1 // pred_region
      %s14 = ssub.s32 2048, 2048
      %15 = vsyncadd [#allocation3], %s14
      %s16 = sshll.u32 [#allocation2], 4
      %s17 = int_to_ptr.vmem [resolvable:$true] %s16
      %22 = dma.hbm_to_vmem [thread:$0]  %s0, 2048, %s17, [#allocation3], 128, 128, 8
    $region5: #{tpu_custom_call.1} parent=1 // pred_fallthru
      _
    // Predicated region
    $region6: #{tpu_custom_call.1} parent=1 // pred_check
      _
    $region7: #{tpu_custom_call.1} parent=1 // pred_check_branch
      %24 = sbr.rel (0) target = $region9
    $region8: #{tpu_custom_call.1} parent=1 // pred_region
      %s26 = ssub.s32 1024, 1024
      %27 = vsyncadd [#allocation6], %s26
      %s28 = sshll.u32 [#allocation5], 4
      %s29 = int_to_ptr.vmem [resolvable:$true] %s28
      %34 = dma.hbm_to_vmem [thread:$0]  %s1, 1024, %s29, [#allocation6], 64, 64, 4
    $region9: #{tpu_custom_call.1} parent=1 // pred_fallthru
      _
    // Predicated region
    $region10: #{tpu_custom_call.1} parent=1 // pred_check
      _
    $region11: #{tpu_custom_call.1} parent=1 // pred_check_branch
      %36 = sbr.rel (0) target = $region13
    $region12: #{tpu_custom_call.1} parent=1 // pred_region
      _
    $region13: #{tpu_custom_call.1} parent=1 // pred_fallthru
      _
    // Predicated region
    $region14: #{tpu_custom_call.1} parent=1 // pred_check
      _
    $region15: #{tpu_custom_call.1} parent=1 // pred_check_branch
      %38 = sbr.rel (0) target = $region17
    $region16: #{tpu_custom_call.1} parent=1 // pred_region
      %39 = dma.done [#allocation3], 2048
    $region17: #{tpu_custom_call.1} parent=1 // pred_fallthru
      _
    // Predicated region
    $region18: #{tpu_custom_call.1} parent=1 // pred_check
      _
    $region19: #{tpu_custom_call.1} parent=1 // pred_check_branch
      %41 = sbr.rel (0) target = $region21
    $region20: #{tpu_custom_call.1} parent=1 // pred_region
      %42 = dma.done [#allocation6], 1024
    $region21: #{tpu_custom_call.1} parent=1 // pred_fallthru
      _
    %v44 = vld [vmem:[#allocation2] sm:$0xff]
    %v45 = vld [vmem:[#allocation2 + $0x8] sm:$0xff]
    %v46 = vld [vmem:[#allocation2 + $0x10] sm:$0xff]
    %v47 = vld [vmem:[#allocation2 + $0x18] sm:$0xff]
    %v48 = vld [vmem:[#allocation2 + $0x20] sm:$0xff]
    %v49 = vld [vmem:[#allocation2 + $0x28] sm:$0xff]
    %v50 = vld [vmem:[#allocation2 + $0x30] sm:$0xff]
    %v51 = vld [vmem:[#allocation2 + $0x38] sm:$0xff]
    %v52 = vld [vmem:[#allocation2 + $0x40] sm:$0xff]
    %v53 = vld [vmem:[#allocation2 + $0x48] sm:$0xff]
    %v54 = vld [vmem:[#allocation2 + $0x50] sm:$0xff]
    %v55 = vld [vmem:[#allocation2 + $0x58] sm:$0xff]
    %v56 = vld [vmem:[#allocation2 + $0x60] sm:$0xff]
    %v57 = vld [vmem:[#allocation2 + $0x68] sm:$0xff]
    %v58 = vld [vmem:[#allocation2 + $0x70] sm:$0xff]
    %v59 = vld [vmem:[#allocation2 + $0x78] sm:$0xff]
    %v60 = vrot.slane %v44, 4
    %v61 = vadd.f32 %v44, %v60
    %v62 = vrot.slane %v61, 2
    %v63 = vadd.f32 %v61, %v62
    %v64 = vrot.slane %v63, 1
    %v65 = vadd.f32 %v63, %v64
    %v66 = vrot.slane %v45, 4
    %v67 = vadd.f32 %v45, %v66
    %v68 = vrot.slane %v67, 2
    %v69 = vadd.f32 %v67, %v68
    %v70 = vrot.slane %v69, 1
    %v71 = vadd.f32 %v69, %v70
    %v72 = vrot.slane %v46, 4
    %v73 = vadd.f32 %v46, %v72
    %v74 = vrot.slane %v73, 2
    %v75 = vadd.f32 %v73, %v74
    %v76 = vrot.slane %v75, 1
    %v77 = vadd.f32 %v75, %v76
    %v78 = vrot.slane %v47, 4
    %v79 = vadd.f32 %v47, %v78
    %v80 = vrot.slane %v79, 2
    %v81 = vadd.f32 %v79, %v80
    %v82 = vrot.slane %v81, 1
    %v83 = vadd.f32 %v81, %v82
    %v84 = vrot.slane %v48, 4
    %v85 = vadd.f32 %v48, %v84
    %v86 = vrot.slane %v85, 2
    %v87 = vadd.f32 %v85, %v86
    %v88 = vrot.slane %v87, 1
    %v89 = vadd.f32 %v87, %v88
    %v90 = vrot.slane %v49, 4
    %v91 = vadd.f32 %v49, %v90
    %v92 = vrot.slane %v91, 2
    %v93 = vadd.f32 %v91, %v92
    %v94 = vrot.slane %v93, 1
    %v95 = vadd.f32 %v93, %v94
    %v96 = vrot.slane %v50, 4
    %v97 = vadd.f32 %v50, %v96
    %v98 = vrot.slane %v97, 2
    %v99 = vadd.f32 %v97, %v98
    %v100 = vrot.slane %v99, 1
    %v101 = vadd.f32 %v99, %v100
    %v102 = vrot.slane %v51, 4
    %v103 = vadd.f32 %v51, %v102
    %v104 = vrot.slane %v103, 2
    %v105 = vadd.f32 %v103, %v104
    %v106 = vrot.slane %v105, 1
    %v107 = vadd.f32 %v105, %v106
    %v108 = vrot.slane %v52, 4
    %v109 = vadd.f32 %v52, %v108
    %v110 = vrot.slane %v109, 2
    %v111 = vadd.f32 %v109, %v110
    %v112 = vrot.slane %v111, 1
    %v113 = vadd.f32 %v111, %v112
    %v114 = vrot.slane %v53, 4
    %v115 = vadd.f32 %v53, %v114
    %v116 = vrot.slane %v115, 2
    %v117 = vadd.f32 %v115, %v116
    %v118 = vrot.slane %v117, 1
    %v119 = vadd.f32 %v117, %v118
    %v120 = vrot.slane %v54, 4
    %v121 = vadd.f32 %v54, %v120
    %v122 = vrot.slane %v121, 2
    %v123 = vadd.f32 %v121, %v122
    %v124 = vrot.slane %v123, 1
    %v125 = vadd.f32 %v123, %v124
    %v126 = vrot.slane %v55, 4
    %v127 = vadd.f32 %v55, %v126
    %v128 = vrot.slane %v127, 2
    %v129 = vadd.f32 %v127, %v128
    %v130 = vrot.slane %v129, 1
    %v131 = vadd.f32 %v129, %v130
    %v132 = vrot.slane %v56, 4
    %v133 = vadd.f32 %v56, %v132
    %v134 = vrot.slane %v133, 2
    %v135 = vadd.f32 %v133, %v134
    %v136 = vrot.slane %v135, 1
    %v137 = vadd.f32 %v135, %v136
    %v138 = vrot.slane %v57, 4
    %v139 = vadd.f32 %v57, %v138
    %v140 = vrot.slane %v139, 2
    %v141 = vadd.f32 %v139, %v140
    %v142 = vrot.slane %v141, 1
    %v143 = vadd.f32 %v141, %v142
    %v144 = vrot.slane %v58, 4
    %v145 = vadd.f32 %v58, %v144
    %v146 = vrot.slane %v145, 2
    %v147 = vadd.f32 %v145, %v146
    %v148 = vrot.slane %v147, 1
    %v149 = vadd.f32 %v147, %v148
    %v150 = vrot.slane %v59, 4
    %v151 = vadd.f32 %v59, %v150
    %v152 = vrot.slane %v151, 2
    %v153 = vadd.f32 %v151, %v152
    %v154 = vrot.slane %v153, 1
    %v155 = vadd.f32 %v153, %v154
    %v156 = vmul.f32 %v65, 0.125
    %v157 = vmul.f32 %v71, 0.125
    %v158 = vmul.f32 %v77, 0.125
    %v159 = vmul.f32 %v83, 0.125
    %v160 = vmul.f32 %v89, 0.125
    %v161 = vmul.f32 %v95, 0.125
    %v162 = vmul.f32 %v101, 0.125
    %v163 = vmul.f32 %v107, 0.125
    %v164 = vmul.f32 %v113, 0.125
    %v165 = vmul.f32 %v119, 0.125
    %v166 = vmul.f32 %v125, 0.125
    %v167 = vmul.f32 %v131, 0.125
    %v168 = vmul.f32 %v137, 0.125
    %v169 = vmul.f32 %v143, 0.125
    %v170 = vmul.f32 %v149, 0.125
    %v171 = vmul.f32 %v155, 0.125
    %v172 = vpack.c.bf16 %v156, %v156
    %v173 = vpack.c.bf16 %v157, %v157
    %v174 = vpack.c.bf16 %v158, %v158
    %v175 = vpack.c.bf16 %v159, %v159
    %v176 = vpack.c.bf16 %v160, %v160
    %v177 = vpack.c.bf16 %v161, %v161
    %v178 = vpack.c.bf16 %v162, %v162
    %v179 = vpack.c.bf16 %v163, %v163
    %v180 = vpack.c.bf16 %v164, %v164
    %v181 = vpack.c.bf16 %v165, %v165
    %v182 = vpack.c.bf16 %v166, %v166
    %v183 = vpack.c.bf16 %v167, %v167
    %v184 = vpack.c.bf16 %v168, %v168
    %v185 = vpack.c.bf16 %v169, %v169
    %v186 = vpack.c.bf16 %v170, %v170
    %v187 = vpack.c.bf16 %v171, %v171
    %v188 = vld [vmem:[#allocation5] sm:$0xf]
    %v189 = vld [vmem:[#allocation5 + $0x4] sm:$0xf]
    %v190 = vld [vmem:[#allocation5 + $0x8] sm:$0xf]
    %v191 = vld [vmem:[#allocation5 + $0xc] sm:$0xf]
    %v192 = vld [vmem:[#allocation5 + $0x10] sm:$0xf]
    %v193 = vld [vmem:[#allocation5 + $0x14] sm:$0xf]
    %v194 = vld [vmem:[#allocation5 + $0x18] sm:$0xf]
    %v195 = vld [vmem:[#allocation5 + $0x1c] sm:$0xf]
    %v196 = vld [vmem:[#allocation5 + $0x20] sm:$0xf]
    %v197 = vld [vmem:[#allocation5 + $0x24] sm:$0xf]
    %v198 = vld [vmem:[#allocation5 + $0x28] sm:$0xf]
    %v199 = vld [vmem:[#allocation5 + $0x2c] sm:$0xf]
    %v200 = vld [vmem:[#allocation5 + $0x30] sm:$0xf]
    %v201 = vld [vmem:[#allocation5 + $0x34] sm:$0xf]
    %v202 = vld [vmem:[#allocation5 + $0x38] sm:$0xf]
    %v203 = vld [vmem:[#allocation5 + $0x3c] sm:$0xf]
    %v204 = vld [vmem:[%s2] sm:$0x1]
    %v206 = vlaneseq
    %v207 = vshrl.u32 %v206, 7
    %v208 = vsub.s32 0, %v207
    %v209 = vrot.slane %v204, %v208
    %v227 = vunpack.c.l.b16 %v172
    %v228 = vunpack.c.l.b16 %v173
    %v229 = vunpack.c.l.b16 %v174
    %v230 = vunpack.c.l.b16 %v175
    %v231 = vunpack.c.l.b16 %v176
    %v232 = vunpack.c.l.b16 %v177
    %v233 = vunpack.c.l.b16 %v178
    %v234 = vunpack.c.l.b16 %v179
    %v235 = vunpack.c.l.b16 %v180
    %v236 = vunpack.c.l.b16 %v181
    %v237 = vunpack.c.l.b16 %v182
    %v238 = vunpack.c.l.b16 %v183
    %v239 = vunpack.c.l.b16 %v184
    %v240 = vunpack.c.l.b16 %v185
    %v241 = vunpack.c.l.b16 %v186
    %v242 = vunpack.c.l.b16 %v187
    %vm243 = vcmask 1041409
    %v244 = vsel %vm243, %v228, %v227
    %vm245 = vcmask 1042434
    %v246 = vsel %vm245, %v229, %v244
    %vm247 = vcmask 1043459
    %v248 = vsel %vm247, %v230, %v246
    %vm249 = vcmask 1044484
    %v250 = vsel %vm249, %v231, %v248
    %vm251 = vcmask 1045509
    %v252 = vsel %vm251, %v232, %v250
    %vm253 = vcmask 1046534
    %v254 = vsel %vm253, %v233, %v252
    %vm255 = vcmask 1047559
    %v256 = vsel %vm255, %v234, %v254
    %v257 = vsel %vm243, %v236, %v235
    %v258 = vsel %vm245, %v237, %v257
    %v259 = vsel %vm247, %v238, %v258
    %v260 = vsel %vm249, %v239, %v259
    %v261 = vsel %vm251, %v240, %v260
    %v262 = vsel %vm253, %v241, %v261
    %v263 = vsel %vm255, %v242, %v262
    %v264 = vpack.c.b16 %v263, %v256
    %v282 = vunpack.c.l.b16 %v188
    %v283 = vunpack.c.l.b16 %v189
    %v284 = vunpack.c.l.b16 %v190
    %v285 = vunpack.c.l.b16 %v191
    %v286 = vunpack.c.l.b16 %v192
    %v287 = vunpack.c.l.b16 %v193
    %v288 = vunpack.c.l.b16 %v194
    %v289 = vunpack.c.l.b16 %v195
    %v290 = vunpack.c.l.b16 %v196
    %v291 = vunpack.c.l.b16 %v197
    %v292 = vunpack.c.l.b16 %v198
    %v293 = vunpack.c.l.b16 %v199
    %v294 = vunpack.c.l.b16 %v200
    %v295 = vunpack.c.l.b16 %v201
    %v296 = vunpack.c.l.b16 %v202
    %v297 = vunpack.c.l.b16 %v203
    %v298 = vpack.c.b16 %v283, %v282
    %v299 = vpack.c.b16 %v285, %v284
    %v300 = vpack.c.b16 %v287, %v286
    %v301 = vpack.c.b16 %v289, %v288
    %v302 = vpack.c.b16 %v291, %v290
    %v303 = vpack.c.b16 %v293, %v292
    %v304 = vpack.c.b16 %v295, %v294
    %v305 = vpack.c.b16 %v297, %v296
    %314 = vmatprep.subr.bf16.mxu0 0
    %315 = vmatpush1.bf16.msra.mxu0 %v298
    %316 = vmatprep.subr.bf16.mxu0 0
    %317 = vmatpush1.bf16.msra.mxu0 %v299
    %318 = vmatprep.subr.bf16.mxu0 0
    %319 = vmatpush1.bf16.msra.mxu0 %v300
    %320 = vmatprep.subr.bf16.mxu0 0
    %321 = vmatpush1.bf16.msra.mxu0 %v301
    %322 = vmatprep.subr.bf16.mxu0 0
    %323 = vmatpush1.bf16.msra.mxu0 %v302
    %324 = vmatprep.subr.bf16.mxu0 0
    %325 = vmatpush1.bf16.msra.mxu0 %v303
    %326 = vmatprep.subr.bf16.mxu0 0
    %327 = vmatpush1.bf16.msra.mxu0 %v304
    %328 = vmatprep.subr.bf16.mxu0 0
    %329 = vmatpush1.bf16.msra.mxu0 %v305
    %330 = vmatprep.subr.bf16.mxu0 0
    %331 = vmatpush1.bf16.msra.mxu0 0
    %332 = vmatprep.subr.bf16.mxu0 0
    %333 = vmatpush1.bf16.msra.mxu0 0
    %334 = vmatprep.subr.bf16.mxu0 0
    %335 = vmatpush1.bf16.msra.mxu0 0
    %336 = vmatprep.subr.bf16.mxu0 0
    %337 = vmatpush1.bf16.msra.mxu0 0
    %338 = vmatprep.subr.bf16.mxu0 0
    %339 = vmatpush1.bf16.msra.mxu0 0
    %340 = vmatprep.subr.bf16.mxu0 0
    %341 = vmatpush1.bf16.msra.mxu0 0
    %342 = vmatprep.subr.bf16.mxu0 0
    %343 = vmatpush1.bf16.msra.mxu0 0
    %344 = vmatprep.subr.bf16.mxu0 0
    %345 = vmatpush1.bf16.msra.mxu0 0
    %346 = vmatprep.mubr.bf16.mxu0 0
    %347 = vmatmul.mubr.bf16.gmra.mrb[0].mxu0 %v264
    %v348 = vpop.f32.mrb[0].mxu0
    %v349 = vadd.f32 %v209, %v348
    %v350 = vpop.f32.mrb[0].mxu0
    %v351 = vpop.f32.mrb[0].mxu0
    %v352 = vadd.f32 %v209, %v351
    %v353 = vpop.f32.mrb[0].mxu0
    %354 = vdwg.mxu0
    %355 = vst [vmem:[#allocation7] sm:$0xff] %v349
    %356 = vst [vmem:[#allocation7 + $0x8] sm:$0xff] %v352
    // Predicated region
    $region22: #{tpu_custom_call.1} parent=1 // pred_check
      _
    $region23: #{tpu_custom_call.1} parent=1 // pred_check_branch
      %358 = sbr.rel (0) target = $region25
    $region24: #{tpu_custom_call.1} parent=1 // pred_region
      %s360 = ssub.s32 256, 256
      %361 = vsyncadd [#allocation4], %s360
      %s362 = sshll.u32 [#allocation7], 4
      %s363 = int_to_ptr.vmem [resolvable:$true] %s362
      %368 = dma.vmem_to_hbm [thread:$0]  %s363, 256, %s3, [#allocation4], 128, 128, 8
    $region25: #{tpu_custom_call.1} parent=1 // pred_fallthru
      _
    // Predicated region
    $region26: #{tpu_custom_call.1} parent=1 // pred_check
      _
    $region27: #{tpu_custom_call.1} parent=1 // pred_check_branch
      %370 = sbr.rel (0) target = $region29
    $region28: #{tpu_custom_call.1} parent=1 // pred_region
      %371 = dma.done [#allocation4], 256
    $region29: #{tpu_custom_call.1} parent=1 // pred_fallthru
      _
    %372 = vsyncpa [#allocation3], 1
    %373 = vsyncpa [#allocation6], 1
    %374 = vsyncpa [#allocation4], 1

</llo_original>
